<compile_context>
chip_gen: v5e
topology: v5e:2x2
jax: 0.10.0
libtpu: 0.0.40
codegen_flags: <defaults>
</compile_context>

<pallas_src>
import functools

import jax
import jax.numpy as jnp
from jax.experimental import pallas as pl
from jax.experimental.pallas import tpu as pltpu

HEAD_WIDTH = 128          # lane-dense fused head output: [pi | v | zero pad]
HIDDEN1 = 128
HIDDEN2_PAD = 128         # hidden layer 2 (logical 64) zero-padded to full lane width
TILE_B_DEFAULT = 4096     # ~9 MiB double-buffered footprint; fits all generations


def _round_up(x, m):
    return ((x + m - 1) // m) * m


def _choose_tile(B, tile_b_max):
    """Pick (tb, n_steps, B_pad) with tb % 8 == 0, tb <= tile_b_max,
    pad waste <= 8 rows per step, and >= 2 grid steps whenever B >= 16
    (so v7x's two TensorCores both get work under 'parallel' semantics)."""
    tile_b_max = max(8, _round_up(tile_b_max, 8))
    B8 = _round_up(max(B, 1), 8)
    n_steps = pl.cdiv(B8, tile_b_max)
    if n_steps == 1 and B8 >= 16:
        n_steps = 2
    tb = _round_up(pl.cdiv(B8, n_steps), 8)
    return tb, n_steps, n_steps * tb


# ----------------------------- Pallas kernel ---------------------------------
def _actor_critic_kernel(x_ref, w1_ref, b1_ref, w2_ref, b2_ref, wh_ref, bh_ref,
                         out_ref):
    """Fused forward pass for one batch tile:
        h1  = relu(x @ W1 + b1)          # (tb, 128)
        h2  = relu(h1 @ W2 + b2)         # (tb, 128)  (cols 64..127 are zero)
        out = h2 @ W_head + b_head       # (tb, 128) = [pi | v | 0-pad]
    Matmuls hit the MXU with f32 accumulation; bias/relu on the VPU; the single
    lane-dense 128-wide output avoids masked partial stores.
    """
    h1 = jnp.dot(x_ref[...], w1_ref[...], preferred_element_type=jnp.float32)
    h1 = jnp.maximum(h1 + b1_ref[...], 0.0)

    h2 = jnp.dot(h1, w2_ref[...], preferred_element_type=jnp.float32)
    h2 = jnp.maximum(h2 + b2_ref[...], 0.0)

    out = jnp.dot(h2, wh_ref[...], preferred_element_type=jnp.float32) + bh_ref[...]
    out_ref[...] = out.astype(out_ref.dtype)


# ------------------------------- wrappers --------------------------------------
@functools.partial(jax.jit, static_argnames=("tile_b", "out_dtype"))
def actor_critic_forward_fused(state, params, *, tile_b=TILE_B_DEFAULT,
                               out_dtype=jnp.float32):
    """Returns the raw fused (B_pad, HEAD_WIDTH) buffer = [pi | v | zero pad].
    Consumers that apply softmax / use the value can slice inside their own
    kernel to avoid extra strided XLA copies."""
    B, D = state.shape
    tb, n_steps, B_pad = _choose_tile(B, tile_b)
    x = state if B_pad == B else jnp.pad(state, ((0, B_pad - B), (0, 0)))

    out = pl.pallas_call(
        _actor_critic_kernel,
        out_shape=jax.ShapeDtypeStruct((B_pad, HEAD_WIDTH), out_dtype),
        grid=(n_steps,),
        in_specs=[
            pl.BlockSpec((tb, D), lambda i: (i, 0)),                   # x tile
            pl.BlockSpec((D, HIDDEN1), lambda i: (0, 0)),              # W1 (resident)
            pl.BlockSpec((1, HIDDEN1), lambda i: (0, 0)),              # b1
            pl.BlockSpec((HIDDEN1, HIDDEN2_PAD), lambda i: (0, 0)),    # W2 (padded)
            pl.BlockSpec((1, HIDDEN2_PAD), lambda i: (0, 0)),          # b2 (padded)
            pl.BlockSpec((HIDDEN2_PAD, HEAD_WIDTH), lambda i: (0, 0)),  # fused head W
            pl.BlockSpec((1, HEAD_WIDTH), lambda i: (0, 0)),           # fused head b
        ],
        out_specs=pl.BlockSpec((tb, HEAD_WIDTH), lambda i: (i, 0)),
        compiler_params=pltpu.CompilerParams(
            dimension_semantics=("parallel",)),
    )(x, params["w1"], params["b1"], params["w2"], params["b2"],
      params["w_head"], params["b_head"])
    return out


def actor_critic_forward(state, params, *, n_actions, tile_b=TILE_B_DEFAULT,
                         out_dtype=jnp.float32):
    """state: (B, input_dims) f32. Returns (pi (B, n_actions), v (B, 1))."""
    B = state.shape[0]
    out = actor_critic_forward_fused(state, params, tile_b=tile_b,
                                     out_dtype=out_dtype)
    out_rows = out if out.shape[0] == B else out[:B]
    pi = out_rows[:, :n_actions]
    v = out_rows[:, n_actions:n_actions + 1]
    return pi, v


# --------------------------- parameter init -----------------------------------
def init_params(key, input_dims, n_actions):
    """PyTorch-default-style init U(-1/sqrt(fan_in), 1/sqrt(fan_in)).
    Weights stored in (in, out) layout; hidden-2 padded 64->128 (zero cols/rows)
    and actor/critic heads fused + zero-padded into one lane-dense
    (128, HEAD_WIDTH) weight at init, so the hot path never transposes or pads."""
    def linear(k, fan_in, fan_out):
        kw, kb = jax.random.split(k)
        bound = 1.0 / jnp.sqrt(jnp.float32(fan_in))
        w = jax.random.uniform(kw, (fan_in, fan_out), jnp.float32, -bound, bound)
        b = jax.random.uniform(kb, (fan_out,), jnp.float32, -bound, bound)
        return w, b

    k1, k2, k3, k4 = jax.random.split(key, 4)
    w1, b1 = linear(k1, input_dims, HIDDEN1)
    w2, b2 = linear(k2, HIDDEN1, 64)
    wpi, bpi = linear(k3, 64, n_actions)
    wv, bv = linear(k4, 64, 1)

    assert n_actions + 1 <= HEAD_WIDTH

    # Pad hidden layer 2 to full lane width (zero columns -> h2[:, 64:] == 0).
    w2_pad = jnp.zeros((HIDDEN1, HIDDEN2_PAD), jnp.float32).at[:, :64].set(w2)
    b2_pad = jnp.zeros((1, HIDDEN2_PAD), jnp.float32).at[0, :64].set(b2)

    # Fused head: zero rows for the padded hidden units, zero cols past pi|v.
    w_head = jnp.zeros((HIDDEN2_PAD, HEAD_WIDTH), jnp.float32)
    w_head = w_head.at[:64, :n_actions].set(wpi)
    w_head = w_head.at[:64, n_actions:n_actions + 1].set(wv)
    b_head = jnp.zeros((1, HEAD_WIDTH), jnp.float32)
    b_head = b_head.at[0, :n_actions].set(bpi)
    b_head = b_head.at[0, n_actions].set(bv[0])

    return {
        "w1": w1, "b1": b1[None, :],
        "w2": w2_pad, "b2": b2_pad,
        "w_head": w_head, "b_head": b_head,
        # unfused copies kept only for the pure-JAX reference check
        "w2_raw": w2, "b2_raw": b2, "wpi": wpi, "bpi": bpi, "wv": wv, "bv": bv,
    }


# ------------------------------- reference ------------------------------------
def reference_forward(state, params):
    h1 = jnp.maximum(state @ params["w1"] + params["b1"], 0.0)
    h2 = jnp.maximum(h1 @ params["w2_raw"] + params["b2_raw"][None, :], 0.0)
    pi = h2 @ params["wpi"] + params["bpi"]
    v = h2 @ params["wv"] + params["bv"][None, :]
    return pi, v


if __name__ == "__main__":
    key = jax.random.PRNGKey(0)
    k_params, k_s1, k_s2 = jax.random.split(key, 3)

    # Small RL-style shapes: 4-dim state, 2 actions.
    input_dims, n_actions = 4, 2
    params = init_params(k_params, input_dims, n_actions)

    # Case 1: tiny batch (single grid step).
    state_small = jax.random.normal(k_s1, (8, input_dims), jnp.float32)
    pi_s, v_s = actor_critic_forward(state_small, params, n_actions=n_actions)
    jax.block_until_ready((pi_s, v_s))
    pi_ref, v_ref = reference_forward(state_small, params)
    assert pi_s.shape == (8, n_actions) and v_s.shape == (8, 1)
    assert jnp.allclose(pi_s, pi_ref, atol=1e-4, rtol=1e-4)
    assert jnp.allclose(v_s, v_ref, atol=1e-4, rtol=1e-4)

    # Case 2: medium batch (>= 2 grid steps, exercises padded rows + megacore path).
    state_med = jax.random.normal(k_s2, (1000, input_dims), jnp.float32)
    pi_m, v_m = actor_critic_forward(state_med, params, n_actions=n_actions)
    jax.block_until_ready((pi_m, v_m))
    pi_ref_m, v_ref_m = reference_forward(state_med, params)
    assert pi_m.shape == (1000, n_actions) and v_m.shape == (1000, 1)
    assert jnp.allclose(pi_m, pi_ref_m, atol=1e-4, rtol=1e-4)
    assert jnp.allclose(v_m, v_ref_m, atol=1e-4, rtol=1e-4)

    print("KERNEL_OK")
</pallas_src>

<mosaic_0001>
module attributes {stable_mosaic.version = 11 : i64} {
  func.func @_actor_critic_kernel(%arg0: i32, %arg1: memref<8x4xf32, #tpu.memory_space<vmem>>, %arg2: memref<4x128xf32, #tpu.memory_space<vmem>>, %arg3: memref<1x128xf32, #tpu.memory_space<vmem>>, %arg4: memref<128x128xf32, #tpu.memory_space<vmem>>, %arg5: memref<1x128xf32, #tpu.memory_space<vmem>>, %arg6: memref<128x128xf32, #tpu.memory_space<vmem>>, %arg7: memref<1x128xf32, #tpu.memory_space<vmem>>, %arg8: memref<8x128xf32, #tpu.memory_space<vmem>>) attributes {dimension_semantics = [#tpu.dimension_semantics<parallel>], iteration_bounds = array<i64: 1>, scalar_prefetch = 0 : i64, scratch_operands = 0 : i64, tpu.core_type = #tpu.core_type<tc>, window_params = [{transform_indices = @transform_0, window_bounds = array<i64: 8, 4>}, {pipeline_mode = #tpu.pipeline_mode<synchronous>, transform_indices = @transform_1, window_bounds = array<i64: 4, 128>}, {pipeline_mode = #tpu.pipeline_mode<synchronous>, transform_indices = @transform_2, window_bounds = array<i64: 1, 128>}, {pipeline_mode = #tpu.pipeline_mode<synchronous>, transform_indices = @transform_3, window_bounds = array<i64: 128, 128>}, {pipeline_mode = #tpu.pipeline_mode<synchronous>, transform_indices = @transform_4, window_bounds = array<i64: 1, 128>}, {pipeline_mode = #tpu.pipeline_mode<synchronous>, transform_indices = @transform_5, window_bounds = array<i64: 128, 128>}, {pipeline_mode = #tpu.pipeline_mode<synchronous>, transform_indices = @transform_6, window_bounds = array<i64: 1, 128>}, {transform_indices = @transform_7, window_bounds = array<i64: 8, 128>}]} {
    %c0 = arith.constant 0 : index
    %c0_0 = arith.constant 0 : index
    %0 = vector.load %arg1[%c0, %c0_0] : memref<8x4xf32, #tpu.memory_space<vmem>>, vector<8x4xf32>
    %c0_1 = arith.constant 0 : index
    %c0_2 = arith.constant 0 : index
    %1 = vector.load %arg2[%c0_1, %c0_2] : memref<4x128xf32, #tpu.memory_space<vmem>>, vector<4x128xf32>
    %cst = arith.constant dense<0.000000e+00> : vector<8x128xf32>
    %2 = tpu.matmul %0, %1, %cst {dimension_numbers = #tpu.dot_dimension_numbers<[1], [0], [0], [1], [0, 0, 1, 1], [], []>} : vector<8x4xf32>, vector<4x128xf32>, vector<8x128xf32> -> vector<8x128xf32>
    %c0_3 = arith.constant 0 : index
    %c0_4 = arith.constant 0 : index
    %3 = vector.load %arg3[%c0_3, %c0_4] : memref<1x128xf32, #tpu.memory_space<vmem>>, vector<1x128xf32>
    %4 = vector.broadcast %3 : vector<1x128xf32> to vector<8x128xf32>
    %5 = arith.addf %2, %4 : vector<8x128xf32>
    %cst_5 = arith.constant 0.000000e+00 : f32
    %6 = vector.broadcast %cst_5 : f32 to vector<8x128xf32>
    %7 = arith.maximumf %5, %6 : vector<8x128xf32>
    %c0_6 = arith.constant 0 : index
    %c0_7 = arith.constant 0 : index
    %8 = vector.load %arg4[%c0_6, %c0_7] : memref<128x128xf32, #tpu.memory_space<vmem>>, vector<128x128xf32>
    %cst_8 = arith.constant dense<0.000000e+00> : vector<8x128xf32>
    %9 = tpu.matmul %7, %8, %cst_8 {dimension_numbers = #tpu.dot_dimension_numbers<[1], [0], [0], [1], [0, 0, 1, 1], [], []>} : vector<8x128xf32>, vector<128x128xf32>, vector<8x128xf32> -> vector<8x128xf32>
    %c0_9 = arith.constant 0 : index
    %c0_10 = arith.constant 0 : index
    %10 = vector.load %arg5[%c0_9, %c0_10] : memref<1x128xf32, #tpu.memory_space<vmem>>, vector<1x128xf32>
    %11 = vector.broadcast %10 : vector<1x128xf32> to vector<8x128xf32>
    %12 = arith.addf %9, %11 : vector<8x128xf32>
    %cst_11 = arith.constant 0.000000e+00 : f32
    %13 = vector.broadcast %cst_11 : f32 to vector<8x128xf32>
    %14 = arith.maximumf %12, %13 : vector<8x128xf32>
    %c0_12 = arith.constant 0 : index
    %c0_13 = arith.constant 0 : index
    %15 = vector.load %arg6[%c0_12, %c0_13] : memref<128x128xf32, #tpu.memory_space<vmem>>, vector<128x128xf32>
    %cst_14 = arith.constant dense<0.000000e+00> : vector<8x128xf32>
    %16 = tpu.matmul %14, %15, %cst_14 {dimension_numbers = #tpu.dot_dimension_numbers<[1], [0], [0], [1], [0, 0, 1, 1], [], []>} : vector<8x128xf32>, vector<128x128xf32>, vector<8x128xf32> -> vector<8x128xf32>
    %c0_15 = arith.constant 0 : index
    %c0_16 = arith.constant 0 : index
    %17 = vector.load %arg7[%c0_15, %c0_16] : memref<1x128xf32, #tpu.memory_space<vmem>>, vector<1x128xf32>
    %18 = vector.broadcast %17 : vector<1x128xf32> to vector<8x128xf32>
    %19 = arith.addf %16, %18 : vector<8x128xf32>
    %c0_17 = arith.constant 0 : index
    %c0_18 = arith.constant 0 : index
    %20 = vector.load %arg8[%c0_17, %c0_18] : memref<8x128xf32, #tpu.memory_space<vmem>>, vector<8x128xf32>
    tpu.vector_store %arg8[%c0_17, %c0_18], %19 {strides = array<i32>} : memref<8x128xf32, #tpu.memory_space<vmem>>, vector<8x128xf32>,
    return
  }
  func.func @transform_0(%arg0: i32) -> (i32, i32) {
    %c0_i32 = arith.constant 0 : i32
    %c0_i32_0 = arith.constant 0 : i32
    return %arg0, %c0_i32 : i32, i32
  }
  func.func @transform_1(%arg0: i32) -> (i32, i32) {
    %c0_i32 = arith.constant 0 : i32
    %c0_i32_0 = arith.constant 0 : i32
    %c0_i32_1 = arith.constant 0 : i32
    return %c0_i32, %c0_i32_0 : i32, i32
  }
  func.func @transform_2(%arg0: i32) -> (i32, i32) {
    %c0_i32 = arith.constant 0 : i32
    %c0_i32_0 = arith.constant 0 : i32
    %c0_i32_1 = arith.constant 0 : i32
    return %c0_i32, %c0_i32_0 : i32, i32
  }
  func.func @transform_3(%arg0: i32) -> (i32, i32) {
    %c0_i32 = arith.constant 0 : i32
    %c0_i32_0 = arith.constant 0 : i32
    %c0_i32_1 = arith.constant 0 : i32
    return %c0_i32, %c0_i32_0 : i32, i32
  }
  func.func @transform_4(%arg0: i32) -> (i32, i32) {
    %c0_i32 = arith.constant 0 : i32
    %c0_i32_0 = arith.constant 0 : i32
    %c0_i32_1 = arith.constant 0 : i32
    return %c0_i32, %c0_i32_0 : i32, i32
  }
  func.func @transform_5(%arg0: i32) -> (i32, i32) {
    %c0_i32 = arith.constant 0 : i32
    %c0_i32_0 = arith.constant 0 : i32
    %c0_i32_1 = arith.constant 0 : i32
    return %c0_i32, %c0_i32_0 : i32, i32
  }
  func.func @transform_6(%arg0: i32) -> (i32, i32) {
    %c0_i32 = arith.constant 0 : i32
    %c0_i32_0 = arith.constant 0 : i32
    %c0_i32_1 = arith.constant 0 : i32
    return %c0_i32, %c0_i32_0 : i32, i32
  }
  func.func @transform_7(%arg0: i32) -> (i32, i32) {
    %c0_i32 = arith.constant 0 : i32
    %c0_i32_0 = arith.constant 0 : i32
    return %arg0, %c0_i32 : i32, i32
  }
}

</mosaic_0001>

<llo_original>
// kernel: actor_critic_forward_fused.1
$region0: #{actor_critic_forward_fused.1}
  #allocation0 [shape = 'u32[]', space=smem, size = 0x4, offset = 0x4, fixed_abs, tag = 'smem constant byte address 0x4 - core index']
  #allocation1 [shape = 'u32[72,128]{1,0:T(1,128)}', space=vmem, size = 0x9000, scoped, tag = 'internal scratch']
  %s0 = inlined_call_operand.vmem [shape: f32[8,4], index: 0, kind: input, shape index: {}]
  %s1 = inlined_call_operand.vmem [shape: f32[4,128], index: 1, kind: input, shape index: {}]
  %s2 = inlined_call_operand.vmem [shape: f32[1,128], index: 2, kind: input, shape index: {}]
  %s3 = inlined_call_operand.hbm [shape: f32[128,128], index: 3, kind: input, shape index: {}]
  %s4 = inlined_call_operand.vmem [shape: f32[1,128], index: 4, kind: input, shape index: {}]
  %s5 = inlined_call_operand.hbm [shape: f32[128,128], index: 5, kind: input, shape index: {}]
  %s6 = inlined_call_operand.vmem [shape: f32[1,128], index: 6, kind: input, shape index: {}]
  %s7 = inlined_call_operand.hbm [shape: f32[8,128], index: 7, kind: output, shape index: {}]
  %s8 = sld [smem:[#allocation0]]
  $region46: #{actor_critic_forward_fused.1} parent=0
    _
  %s10 = ssub.s32 1, %s8
  %s11 = scalar_select 0, %s10, %s8
  $region1: #{actor_critic_forward_fused.1} parent=0
    #allocation2 [shape = 'u8[65536]{0}', space=vmem, size = 0x10000, scoped, tag = 'input window, operand 3, single buffered']
    #allocation3 [shape = 's32[1]{0}', space=sflag, size = 0x4, scoped, tag = 'scoped memory for actor_critic_forward_fused.1']
    #allocation4 [shape = 's32[1]{0}', space=sflag, size = 0x4, scoped, tag = 'scoped memory for actor_critic_forward_fused.1']
    #allocation5 [shape = 'u8[65536]{0}', space=vmem, size = 0x10000, scoped, tag = 'input window, operand 5, single buffered']
    #allocation6 [shape = 's32[1]{0}', space=sflag, size = 0x4, scoped, tag = 'scoped memory for actor_critic_forward_fused.1']
    #allocation7 [shape = 'u8[4096]{0}', space=vmem, size = 0x1000, scoped, tag = 'output window, operand 0, single buffered']
    %12 = vsyncpa [#allocation3], 0
    %13 = vsyncpa [#allocation6], 0
    %14 = vsyncpa [#allocation4], 0
    // Predicated region
    $region2: #{actor_critic_forward_fused.1} parent=1 // pred_check
      _
    $region3: #{actor_critic_forward_fused.1} parent=1 // pred_check_branch
      %16 = sbr.rel (0) target = $region5
    $region4: #{actor_critic_forward_fused.1} parent=1 // pred_region
      _
    $region5: #{actor_critic_forward_fused.1} parent=1 // pred_fallthru
      _
    // Predicated region
    $region6: #{actor_critic_forward_fused.1} parent=1 // pred_check
      _
    $region7: #{actor_critic_forward_fused.1} parent=1 // pred_check_branch
      %18 = sbr.rel (0) target = $region9
    $region8: #{actor_critic_forward_fused.1} parent=1 // pred_region
      _
    $region9: #{actor_critic_forward_fused.1} parent=1 // pred_fallthru
      _
    // Predicated region
    $region10: #{actor_critic_forward_fused.1} parent=1 // pred_check
      _
    $region11: #{actor_critic_forward_fused.1} parent=1 // pred_check_branch
      %20 = sbr.rel (0) target = $region13
    $region12: #{actor_critic_forward_fused.1} parent=1 // pred_region
      _
    $region13: #{actor_critic_forward_fused.1} parent=1 // pred_fallthru
      _
    // Predicated region
    $region14: #{actor_critic_forward_fused.1} parent=1 // pred_check
      _
    $region15: #{actor_critic_forward_fused.1} parent=1 // pred_check_branch
      %22 = sbr.rel (0) target = $region17
    $region16: #{actor_critic_forward_fused.1} parent=1 // pred_region
      %24 = vsyncadd [#allocation3], 0
      %s25 = sshll.u32 %s3, 4
      %s26 = int_to_ptr.hbm [resolvable:$true] %s25
      %s27 = sshll.u32 [#allocation2], 4
      %s28 = int_to_ptr.vmem [resolvable:$true] %s27
      %33 = dma.hbm_to_vmem [thread:$0]  %s26, 2048, %s28, [#allocation3], 128, 128, 8
    $region17: #{actor_critic_forward_fused.1} parent=1 // pred_fallthru
      _
    // Predicated region
    $region18: #{actor_critic_forward_fused.1} parent=1 // pred_check
      _
    $region19: #{actor_critic_forward_fused.1} parent=1 // pred_check_branch
      %35 = sbr.rel (0) target = $region21
    $region20: #{actor_critic_forward_fused.1} parent=1 // pred_region
      _
    $region21: #{actor_critic_forward_fused.1} parent=1 // pred_fallthru
      _
    // Predicated region
    $region22: #{actor_critic_forward_fused.1} parent=1 // pred_check
      _
    $region23: #{actor_critic_forward_fused.1} parent=1 // pred_check_branch
      %37 = sbr.rel (0) target = $region25
    $region24: #{actor_critic_forward_fused.1} parent=1 // pred_region
      %39 = vsyncadd [#allocation6], 0
      %s40 = sshll.u32 %s5, 4
      %s41 = int_to_ptr.hbm [resolvable:$true] %s40
      %s42 = sshll.u32 [#allocation5], 4
      %s43 = int_to_ptr.vmem [resolvable:$true] %s42
      %48 = dma.hbm_to_vmem [thread:$0]  %s41, 2048, %s43, [#allocation6], 128, 128, 8
    $region25: #{actor_critic_forward_fused.1} parent=1 // pred_fallthru
      _
    // Predicated region
    $region26: #{actor_critic_forward_fused.1} parent=1 // pred_check
      _
    $region27: #{actor_critic_forward_fused.1} parent=1 // pred_check_branch
      %50 = sbr.rel (0) target = $region29
    $region28: #{actor_critic_forward_fused.1} parent=1 // pred_region
      _
    $region29: #{actor_critic_forward_fused.1} parent=1 // pred_fallthru
      _
    // Predicated region
    $region30: #{actor_critic_forward_fused.1} parent=1 // pred_check
      _
    $region31: #{actor_critic_forward_fused.1} parent=1 // pred_check_branch
      %52 = sbr.rel (0) target = $region33
    $region32: #{actor_critic_forward_fused.1} parent=1 // pred_region
      %54 = dma.done [#allocation3], 2048
    $region33: #{actor_critic_forward_fused.1} parent=1 // pred_fallthru
      _
    // Predicated region
    $region34: #{actor_critic_forward_fused.1} parent=1 // pred_check
      _
    $region35: #{actor_critic_forward_fused.1} parent=1 // pred_check_branch
      %56 = sbr.rel (0) target = $region37
    $region36: #{actor_critic_forward_fused.1} parent=1 // pred_region
      %58 = dma.done [#allocation6], 2048
    $region37: #{actor_critic_forward_fused.1} parent=1 // pred_fallthru
      _
    %v59 = vld [vmem:[%s0] sm:$0xff]
    %v60 = vld [vmem:[%s1] sm:$0xf]
    %v61 = vld [vmem:[%s2] sm:$0x1]
    %v63 = vperm.slane %v61, 0
    %vm65 = vcmask 31744
    %v67 = vsel %vm65, %v59, 0
    %vm69 = vcmask 1043456
    %v71 = vsel %vm69, %v60, 0
    %73 = vmatpush.msra.mxu0 0.0
    %74 = vmatpush.msra.mxu0 0.0
    %75 = vmatpush.msra.mxu0 0.0
    %76 = vmatpush.msra.mxu0 0.0
    %77 = vmatpush.msra.mxu0 0.0
    %78 = vmatpush.msra.mxu0 0.0
    %79 = vmatpush.msra.mxu0 0.0
    %80 = vmatpush.msra.mxu0 0.0
    %81 = vmatpush.msra.mxu0 0.0
    %82 = vmatpush.msra.mxu0 0.0
    %83 = vmatpush.msra.mxu0 0.0
    %84 = vmatpush.msra.mxu0 0.0
    %85 = vmatpush.msra.mxu0 0.0
    %86 = vmatpush.msra.mxu0 0.0
    %87 = vmatpush.msra.mxu0 0.0
    %88 = vmatpush.msra.mxu0 %v71
    %89 = vmatmul.f32.gmra.mxu0 %v67
    %v90 = vpop.f32.mrf.mxu0
    %v91 = vadd.f32 %v63, %v90
    %92 = vdwg.mxu0
    %v93 = vmax.f32 %v91, 0.0
    %v94 = vld [vmem:[#allocation2] sm:$0xff]
    %v95 = vld [vmem:[#allocation2 + $0x8] sm:$0xff]
    %v96 = vld [vmem:[#allocation2 + $0x10] sm:$0xff]
    %v97 = vld [vmem:[#allocation2 + $0x18] sm:$0xff]
    %v98 = vld [vmem:[#allocation2 + $0x20] sm:$0xff]
    %v99 = vld [vmem:[#allocation2 + $0x28] sm:$0xff]
    %v100 = vld [vmem:[#allocation2 + $0x30] sm:$0xff]
    %v101 = vld [vmem:[#allocation2 + $0x38] sm:$0xff]
    %v102 = vld [vmem:[#allocation2 + $0x40] sm:$0xff]
    %v103 = vld [vmem:[#allocation2 + $0x48] sm:$0xff]
    %v104 = vld [vmem:[#allocation2 + $0x50] sm:$0xff]
    %v105 = vld [vmem:[#allocation2 + $0x58] sm:$0xff]
    %v106 = vld [vmem:[#allocation2 + $0x60] sm:$0xff]
    %v107 = vld [vmem:[#allocation2 + $0x68] sm:$0xff]
    %v108 = vld [vmem:[#allocation2 + $0x70] sm:$0xff]
    %v109 = vld [vmem:[#allocation2 + $0x78] sm:$0xff]
    %v110 = vld [vmem:[%s4] sm:$0x1]
    %v112 = vperm.slane %v110, 0
    %114 = vmatpush.msra.mxu0 %v109
    %115 = vmatpush.msra.mxu0 %v108
    %116 = vmatpush.msra.mxu0 %v107
    %117 = vmatpush.msra.mxu0 %v106
    %118 = vmatpush.msra.mxu0 %v105
    %119 = vmatpush.msra.mxu0 %v104
    %120 = vmatpush.msra.mxu0 %v103
    %121 = vmatpush.msra.mxu0 %v102
    %122 = vmatpush.msra.mxu0 %v101
    %123 = vmatpush.msra.mxu0 %v100
    %124 = vmatpush.msra.mxu0 %v99
    %125 = vmatpush.msra.mxu0 %v98
    %126 = vmatpush.msra.mxu0 %v97
    %127 = vmatpush.msra.mxu0 %v96
    %128 = vmatpush.msra.mxu0 %v95
    %129 = vmatpush.msra.mxu0 %v94
    %130 = vmatmul.f32.gmra.mxu0 %v93
    %v131 = vpop.f32.mrf.mxu0
    %v132 = vadd.f32 %v112, %v131
    %133 = vdwg.mxu0
    %v134 = vmax.f32 %v132, 0.0
    %v135 = vld [vmem:[#allocation5] sm:$0xff]
    %v136 = vld [vmem:[#allocation5 + $0x8] sm:$0xff]
    %v137 = vld [vmem:[#allocation5 + $0x10] sm:$0xff]
    %v138 = vld [vmem:[#allocation5 + $0x18] sm:$0xff]
    %v139 = vld [vmem:[#allocation5 + $0x20] sm:$0xff]
    %v140 = vld [vmem:[#allocation5 + $0x28] sm:$0xff]
    %v141 = vld [vmem:[#allocation5 + $0x30] sm:$0xff]
    %v142 = vld [vmem:[#allocation5 + $0x38] sm:$0xff]
    %v143 = vld [vmem:[#allocation5 + $0x40] sm:$0xff]
    %v144 = vld [vmem:[#allocation5 + $0x48] sm:$0xff]
    %v145 = vld [vmem:[#allocation5 + $0x50] sm:$0xff]
    %v146 = vld [vmem:[#allocation5 + $0x58] sm:$0xff]
    %v147 = vld [vmem:[#allocation5 + $0x60] sm:$0xff]
    %v148 = vld [vmem:[#allocation5 + $0x68] sm:$0xff]
    %v149 = vld [vmem:[#allocation5 + $0x70] sm:$0xff]
    %v150 = vld [vmem:[#allocation5 + $0x78] sm:$0xff]
    %v151 = vld [vmem:[%s6] sm:$0x1]
    %v153 = vperm.slane %v151, 0
    %155 = vmatpush.msra.mxu0 %v150
    %156 = vmatpush.msra.mxu0 %v149
    %157 = vmatpush.msra.mxu0 %v148
    %158 = vmatpush.msra.mxu0 %v147
    %159 = vmatpush.msra.mxu0 %v146
    %160 = vmatpush.msra.mxu0 %v145
    %161 = vmatpush.msra.mxu0 %v144
    %162 = vmatpush.msra.mxu0 %v143
    %163 = vmatpush.msra.mxu0 %v142
    %164 = vmatpush.msra.mxu0 %v141
    %165 = vmatpush.msra.mxu0 %v140
    %166 = vmatpush.msra.mxu0 %v139
    %167 = vmatpush.msra.mxu0 %v138
    %168 = vmatpush.msra.mxu0 %v137
    %169 = vmatpush.msra.mxu0 %v136
    %170 = vmatpush.msra.mxu0 %v135
    %171 = vmatmul.f32.gmra.mxu0 %v134
    %v172 = vpop.f32.mrf.mxu0
    %v173 = vadd.f32 %v153, %v172
    %174 = vdwg.mxu0
    %175 = vst [vmem:[#allocation7] sm:$0xff] %v173
    // Predicated region
    $region38: #{actor_critic_forward_fused.1} parent=1 // pred_check
      _
    $region39: #{actor_critic_forward_fused.1} parent=1 // pred_check_branch
      %177 = sbr.rel (0) target = $region41
    $region40: #{actor_critic_forward_fused.1} parent=1 // pred_region
      %179 = vsyncadd [#allocation4], 0
      %s181 = sshll.u32 [#allocation7], 4
      %s182 = int_to_ptr.vmem [resolvable:$true] %s181
      %s183 = sshll.u32 %s7, 4
      %s184 = int_to_ptr.hbm [resolvable:$true] %s183
      %186 = dma.vmem_to_hbm [thread:$0]  %s182, 128, %s184, [#allocation4]
    $region41: #{actor_critic_forward_fused.1} parent=1 // pred_fallthru
      _
    // Predicated region
    $region42: #{actor_critic_forward_fused.1} parent=1 // pred_check
      _
    $region43: #{actor_critic_forward_fused.1} parent=1 // pred_check_branch
      %188 = sbr.rel (0) target = $region45
    $region44: #{actor_critic_forward_fused.1} parent=1 // pred_region
      %190 = dma.done [#allocation4], 128
    $region45: #{actor_critic_forward_fused.1} parent=1 // pred_fallthru
      _
    %191 = vsyncpa [#allocation3], 1
    %192 = vsyncpa [#allocation6], 1
    %193 = vsyncpa [#allocation4], 1

</llo_original>
